<compile_context>
chip_gen: v5e
topology: v5e:2x2
jax: 0.10.0
libtpu: 0.0.40
codegen_flags: <defaults>
</compile_context>

<pallas_src>
import math

import jax
import jax.numpy as jnp
from jax import lax
from jax.experimental import pallas as pl
from jax.experimental.pallas import tpu as pltpu


def _round_up(x, m):
    return ((x + m - 1) // m) * m


def make_pair_attn_kernel(lk_real):
    """One grid step computes one (batch, Lq-tile) block for ALL heads."""

    def kernel(g2_ref, g1_ref, a_ref, mask_ref, out_ref):
        # g2_ref  : (1, tq, D)            query-side activations (compute dtype)
        # g1_ref  : (1, Lk_pad, D)        key-side activations (padded along Lk)
        # a_ref   : (D, H*D)              stacked A_h = Wq_h^T Wk_h / sqrt(d_k)
        # mask_ref: (1, tq, Lk_pad)       int8 mask (0 -> masked-out / padding)
        # out_ref : (1, H, tq, Lk_pad)    attention probabilities
        n_head = out_ref.shape[1]
        d_model = g2_ref.shape[2]

        g2 = g2_ref[0]                      # (tq, D)
        g1 = g1_ref[0]                      # (Lk_pad, D)

        # Single wide MXU call over all heads (N = H*D), f32 accumulate.
        t = jnp.dot(g2, a_ref[...], preferred_element_type=jnp.float32)   # (tq, H*D)
        t = t.astype(g1.dtype)

        # Mask / padding fill computed once, shared by every head.
        maskb = mask_ref[0] != 0                                          # (tq, Lk_pad)
        col = lax.broadcasted_iota(jnp.int32, (g2.shape[0], g1.shape[0]), 1)
        # Real masked keys -> -1e9 (matches torch masked_fill); padded keys -> -inf
        # so a fully-masked real row still normalizes over the real Lk columns.
        fill = jnp.where(col < lk_real, jnp.float32(-1e9), jnp.float32(-jnp.inf))

        for h in range(n_head):             # static unroll; head count is small
            t_h = t[:, h * d_model:(h + 1) * d_model]                     # (tq, D)
            # 'qd,kd->qk' : contract over d_model, no in-kernel transpose.
            scores = lax.dot_general(
                t_h, g1,
                dimension_numbers=(((1,), (1,)), ((), ())),
                preferred_element_type=jnp.float32)                       # (tq, Lk_pad)
            scores = jnp.where(maskb, scores, fill)

            m = jnp.max(scores, axis=-1, keepdims=True)
            e = jnp.exp(scores - m)
            denom = jnp.sum(e, axis=-1, keepdims=True)
            out_ref[0, h] = (e * pl.reciprocal(denom, approx=True)).astype(out_ref.dtype)

    return kernel


def pair_decoder_layer_attn(g2_embs, g1_embs, mask, wq, wk, *,
                            n_head, d_k,
                            compute_dtype=jnp.bfloat16,
                            out_dtype=jnp.float32,
                            return_padded=False):
    """Pallas implementation of PairDecoderLayer.forward (returns g1_g2_attn).

    Set out_dtype=jnp.bfloat16 to halve output HBM traffic, and
    return_padded=True to skip the trailing slice (consumer handles padding).
    """
    B, Lq, D = g2_embs.shape
    _, Lk, _ = g1_embs.shape
    scale = 1.0 / math.sqrt(d_k)

    # Host-side fusion (free): scores_h = (g2 Wq_h^T)(g1 Wk_h^T)^T / sqrt(d_k)
    #                                   = g2 @ A_h @ g1^T
    # Stack A_h horizontally -> (D, H*D) so the first in-kernel matmul has an
    # MXU N-dim of H*D instead of D.
    wq3 = wq.astype(jnp.float32).reshape(n_head, d_k, D)
    wk3 = wk.astype(jnp.float32).reshape(n_head, d_k, D)
    a_mat = jnp.einsum('hkd,hke->hde', wq3, wk3) * scale                   # (H, D, D)
    a_stk = jnp.transpose(a_mat, (1, 0, 2)).reshape(D, n_head * D).astype(compute_dtype)

    # Pad Lk to a multiple of 128 (lane-dense matmul N-dim / softmax / stores);
    # pad Lq to a multiple of the query tile.
    Lk_pad = _round_up(Lk, 128)
    out_itemsize = jnp.dtype(out_dtype).itemsize
    cdt = jnp.dtype(compute_dtype).itemsize
    if Lq <= 128:
        tq = _round_up(Lq, 16)              # bf16 packs 16 sublanes per vreg
        Lq_pad = tq
    else:
        tq = 128
        for cand in (512, 256, 128):        # larger tiles -> closer to HBM roofline
            out_blk = 2 * n_head * cand * Lk_pad * out_itemsize     # double-buffered out
            tmp = 4 * cand * Lk_pad * 4                             # f32 temporaries
            if out_blk + tmp <= 24 * 1024 * 1024:
                tq = cand
                break
        Lq_pad = _round_up(Lq, tq)

    g2_p = jnp.pad(g2_embs, ((0, 0), (0, Lq_pad - Lq), (0, 0))).astype(compute_dtype)
    g1_p = jnp.pad(g1_embs, ((0, 0), (0, Lk_pad - Lk), (0, 0))).astype(compute_dtype)
    mask_p = jnp.pad(mask.astype(jnp.int8),
                     ((0, 0), (0, Lq_pad - Lq), (0, Lk_pad - Lk)))

    # VMEM footprint estimate (double-buffered blocks + in-kernel temporaries).
    # TODO(synk): for very large Lk (v7x 64 MiB VMEM) this needs an Lk-tiled
    # flash-style online-softmax variant; not needed at these shapes.
    vmem_bytes = (2 * n_head * tq * Lk_pad * out_itemsize      # out blocks
                  + 2 * Lk_pad * D * cdt                       # g1 blocks
                  + 2 * tq * D * cdt                           # g2 blocks
                  + 2 * tq * Lk_pad * 1                        # mask blocks
                  + 2 * D * n_head * D * cdt                   # A blocks
                  + 2 * tq * n_head * D * 4                    # t
                  + 4 * tq * Lk_pad * 4)                       # scores/e temporaries
    vmem_limit = int(min(max(32 * 1024 * 1024, int(vmem_bytes * 1.5)),
                         64 * 1024 * 1024))

    flops = 2 * B * n_head * Lq_pad * (D * D + Lk_pad * D)
    transcendentals = B * n_head * Lq_pad * Lk_pad
    bytes_accessed = int(B * n_head * Lq_pad * Lk_pad * out_itemsize
                         + g2_p.size * cdt + g1_p.size * cdt
                         + mask_p.size + a_stk.size * cdt)

    kernel = make_pair_attn_kernel(Lk)
    out = pl.pallas_call(
        kernel,
        out_shape=jax.ShapeDtypeStruct((B, n_head, Lq_pad, Lk_pad), out_dtype),
        grid_spec=pltpu.PrefetchScalarGridSpec(
            num_scalar_prefetch=0,
            grid=(B, Lq_pad // tq),
            in_specs=[
                pl.BlockSpec((1, tq, D), lambda b, q: (b, q, 0)),          # g2
                pl.BlockSpec((1, Lk_pad, D), lambda b, q: (b, 0, 0)),      # g1 (q-invariant)
                pl.BlockSpec((D, n_head * D), lambda b, q: (0, 0)),        # A (grid-invariant)
                pl.BlockSpec((1, tq, Lk_pad), lambda b, q: (b, q, 0)),     # mask
            ],
            out_specs=pl.BlockSpec((1, n_head, tq, Lk_pad),
                                   lambda b, q: (b, 0, q, 0)),
        ),
        compiler_params=pltpu.CompilerParams(
            dimension_semantics=("parallel", "parallel"),
            vmem_limit_bytes=vmem_limit),
        cost_estimate=pl.CostEstimate(flops=flops,
                                      transcendentals=transcendentals,
                                      bytes_accessed=bytes_accessed),
    )(g2_p, g1_p, a_stk, mask_p)

    if return_padded or (Lq_pad == Lq and Lk_pad == Lk):
        return out
    return out[:, :, :Lq, :Lk]


def reference_attn(g2_embs, g1_embs, mask, wq, wk, *, n_head, d_k):
    """Pure-JAX f32 reference mirroring the PyTorch MultiHeadAttention math."""
    B, Lq, D = g2_embs.shape
    _, Lk, _ = g1_embs.shape
    q = jnp.einsum('bld,ed->ble', g2_embs, wq).reshape(B, Lq, n_head, d_k)
    k = jnp.einsum('bld,ed->ble', g1_embs, wk).reshape(B, Lk, n_head, d_k)
    q = jnp.transpose(q, (0, 2, 1, 3))                 # (B, H, Lq, dk)
    k = jnp.transpose(k, (0, 2, 1, 3))                 # (B, H, Lk, dk)
    scores = jnp.einsum('bhqd,bhkd->bhqk', q / math.sqrt(d_k), k)
    scores = jnp.where(mask[:, None, :, :] == 0, -1e9, scores)
    return jax.nn.softmax(scores, axis=-1)


if __name__ == "__main__":
    # Module hyper-params (small, consistent with forward()):
    B, Lq, Lk = 2, 8, 16
    d_model, n_head, d_k, d_v = 32, 4, 8, 8
    # TODO(synk): w_vs / fc / dropout / layer_norm are computed in the PyTorch
    # forward but do not influence the returned g1_g2_attn, so they are omitted.

    key = jax.random.PRNGKey(0)
    k1, k2, k3, k4, k5 = jax.random.split(key, 5)

    g2_embs = jax.random.normal(k1, (B, Lq, d_model), dtype=jnp.float32)
    g1_embs = jax.random.normal(k2, (B, Lk, d_model), dtype=jnp.float32)
    # 0/1 attention mask over (B, Lq, Lk); 0 means masked.
    mask = (jax.random.uniform(k3, (B, Lq, Lk)) > 0.2)

    # Deterministic parameter init (nn.Linear-like uniform scale).
    bound = 1.0 / math.sqrt(d_model)
    wq = jax.random.uniform(k4, (n_head * d_k, d_model),
                            minval=-bound, maxval=bound, dtype=jnp.float32)
    wk = jax.random.uniform(k5, (n_head * d_k, d_model),
                            minval=-bound, maxval=bound, dtype=jnp.float32)

    ref = reference_attn(g2_embs, g1_embs, mask.astype(jnp.float32), wq, wk,
                         n_head=n_head, d_k=d_k)

    # Default (module-faithful) f32 probability map.
    attn = pair_decoder_layer_attn(g2_embs, g1_embs, mask, wq, wk,
                                   n_head=n_head, d_k=d_k)
    attn = jax.block_until_ready(attn)
    assert attn.shape == (B, n_head, Lq, Lk)
    # bf16 matmul inputs + approx reciprocal -> relaxed tolerance.
    assert jnp.allclose(attn, ref, atol=2e-2, rtol=2e-2)

    # Optional low-HBM-traffic variant: bf16 output (halves write bytes).
    attn_bf16 = pair_decoder_layer_attn(g2_embs, g1_embs, mask, wq, wk,
                                        n_head=n_head, d_k=d_k,
                                        out_dtype=jnp.bfloat16)
    attn_bf16 = jax.block_until_ready(attn_bf16)
    assert attn_bf16.shape == (B, n_head, Lq, Lk)
    assert jnp.allclose(attn_bf16.astype(jnp.float32), ref, atol=3e-2, rtol=3e-2)

    print("KERNEL_OK")
</pallas_src>

<mosaic_0001>
module attributes {stable_mosaic.version = 11 : i64} {
  func.func @kernel(%arg0: i32, %arg1: i32, %arg2: memref<1x16x32xbf16, #tpu.memory_space<vmem>>, %arg3: memref<1x128x32xbf16, #tpu.memory_space<vmem>>, %arg4: memref<32x128xbf16, #tpu.memory_space<vmem>>, %arg5: memref<1x16x128xi8, #tpu.memory_space<vmem>>, %arg6: memref<1x4x16x128xf32, #tpu.memory_space<vmem>>) attributes {dimension_semantics = [#tpu.dimension_semantics<parallel>, #tpu.dimension_semantics<parallel>], iteration_bounds = array<i64: 2, 1>, scalar_prefetch = 0 : i64, scratch_operands = 0 : i64, tpu.core_type = #tpu.core_type<tc>, window_params = [{transform_indices = @transform_0, window_bounds = array<i64: 1, 16, 32>}, {transform_indices = @transform_1, window_bounds = array<i64: 1, 128, 32>}, {pipeline_mode = #tpu.pipeline_mode<synchronous>, transform_indices = @transform_2, window_bounds = array<i64: 32, 128>}, {transform_indices = @transform_3, window_bounds = array<i64: 1, 16, 128>}, {transform_indices = @transform_4, window_bounds = array<i64: 1, 4, 16, 128>}]} {
    %c0 = arith.constant 0 : index
    %c0_0 = arith.constant 0 : index
    %c0_1 = arith.constant 0 : index
    %0 = vector.load %arg2[%c0, %c0_0, %c0_1] : memref<1x16x32xbf16, #tpu.memory_space<vmem>>, vector<1x16x32xbf16>
    %1 = vector.shape_cast %0 : vector<1x16x32xbf16> to vector<16x32xbf16>
    %c0_2 = arith.constant 0 : index
    %c0_3 = arith.constant 0 : index
    %c0_4 = arith.constant 0 : index
    %2 = vector.load %arg3[%c0_2, %c0_3, %c0_4] : memref<1x128x32xbf16, #tpu.memory_space<vmem>>, vector<1x128x32xbf16>
    %3 = vector.shape_cast %2 : vector<1x128x32xbf16> to vector<128x32xbf16>
    %c0_5 = arith.constant 0 : index
    %c0_6 = arith.constant 0 : index
    %4 = vector.load %arg4[%c0_5, %c0_6] : memref<32x128xbf16, #tpu.memory_space<vmem>>, vector<32x128xbf16>
    %cst = arith.constant dense<0.000000e+00> : vector<16x128xf32>
    %5 = tpu.matmul %1, %4, %cst {dimension_numbers = #tpu.dot_dimension_numbers<[1], [0], [0], [1], [0, 0, 1, 1], [], []>} : vector<16x32xbf16>, vector<32x128xbf16>, vector<16x128xf32> -> vector<16x128xf32>
    %6 = arith.truncf %5 : vector<16x128xf32> to vector<16x128xbf16>
    %c0_7 = arith.constant 0 : index
    %c0_8 = arith.constant 0 : index
    %c0_9 = arith.constant 0 : index
    %7 = vector.load %arg5[%c0_7, %c0_8, %c0_9] : memref<1x16x128xi8, #tpu.memory_space<vmem>>, vector<1x16x128xi8>
    %8 = vector.shape_cast %7 : vector<1x16x128xi8> to vector<16x128xi8>
    %c0_i8 = arith.constant 0 : i8
    %9 = vector.broadcast %c0_i8 : i8 to vector<16x128xi8>
    %10 = arith.cmpi ne, %8, %9 : vector<16x128xi8>
    %11 = tpu.iota {dimensions = array<i32: 1>} : vector<16x128xi32>
    %c16_i32 = arith.constant 16 : i32
    %12 = vector.broadcast %c16_i32 : i32 to vector<16x128xi32>
    %13 = arith.cmpi slt, %11, %12 : vector<16x128xi32>
    %cst_10 = arith.constant -1.000000e+09 : f32
    %cst_11 = arith.constant 0xFF800000 : f32
    %14 = vector.broadcast %cst_10 : f32 to vector<16x128xf32>
    %15 = vector.broadcast %cst_11 : f32 to vector<16x128xf32>
    %16 = arith.select %13, %14, %15 : vector<16x128xi1>, vector<16x128xf32>
    %17 = vector.extract_strided_slice %6 {offsets = [0, 0], sizes = [16, 32], strides = [1, 1]} : vector<16x128xbf16> to vector<16x32xbf16>
    %cst_12 = arith.constant dense<0.000000e+00> : vector<16x128xf32>
    %18 = tpu.matmul %17, %3, %cst_12 {dimension_numbers = #tpu.dot_dimension_numbers<[1], [1], [0], [0], [0, 0, 1, 0], [], []>} : vector<16x32xbf16>, vector<128x32xbf16>, vector<16x128xf32> -> vector<16x128xf32>
    %19 = arith.select %10, %18, %16 : vector<16x128xi1>, vector<16x128xf32>
    %cst_13 = arith.constant dense<0xFF800000> : vector<16xf32>
    %20 = vector.multi_reduction <maximumf>, %19, %cst_13 [1] : vector<16x128xf32> to vector<16xf32>
    %21 = vector.shape_cast %20 : vector<16xf32> to vector<16x1xf32>
    %22 = vector.broadcast %21 : vector<16x1xf32> to vector<16x128xf32>
    %23 = arith.subf %19, %22 : vector<16x128xf32>
    %24 = math.exp %23 : vector<16x128xf32>
    %cst_14 = arith.constant dense<0.000000e+00> : vector<16xf32>
    %25 = vector.multi_reduction <add>, %24, %cst_14 [1] : vector<16x128xf32> to vector<16xf32>
    %26 = vector.shape_cast %25 : vector<16xf32> to vector<16x1xf32>
    %27 = tpu.reciprocal %26 {approx = true} : vector<16x1xf32> -> vector<16x1xf32>
    %28 = vector.broadcast %27 : vector<16x1xf32> to vector<16x128xf32>
    %29 = arith.mulf %24, %28 : vector<16x128xf32>
    %c0_15 = arith.constant 0 : index
    %c0_16 = arith.constant 0 : index
    %c0_17 = arith.constant 0 : index
    %c0_18 = arith.constant 0 : index
    %30 = vector.load %arg6[%c0_15, %c0_16, %c0_17, %c0_18] : memref<1x4x16x128xf32, #tpu.memory_space<vmem>>, vector<1x1x16x128xf32>
    %31 = vector.shape_cast %30 : vector<1x1x16x128xf32> to vector<16x128xf32>
    %32 = vector.shape_cast %29 : vector<16x128xf32> to vector<1x1x16x128xf32>
    tpu.vector_store %arg6[%c0_15, %c0_16, %c0_17, %c0_18], %32 {strides = array<i32>} : memref<1x4x16x128xf32, #tpu.memory_space<vmem>>, vector<1x1x16x128xf32>,
    %33 = vector.extract_strided_slice %6 {offsets = [0, 32], sizes = [16, 32], strides = [1, 1]} : vector<16x128xbf16> to vector<16x32xbf16>
    %cst_19 = arith.constant dense<0.000000e+00> : vector<16x128xf32>
    %34 = tpu.matmul %33, %3, %cst_19 {dimension_numbers = #tpu.dot_dimension_numbers<[1], [1], [0], [0], [0, 0, 1, 0], [], []>} : vector<16x32xbf16>, vector<128x32xbf16>, vector<16x128xf32> -> vector<16x128xf32>
    %35 = arith.select %10, %34, %16 : vector<16x128xi1>, vector<16x128xf32>
    %cst_20 = arith.constant dense<0xFF800000> : vector<16xf32>
    %36 = vector.multi_reduction <maximumf>, %35, %cst_20 [1] : vector<16x128xf32> to vector<16xf32>
    %37 = vector.shape_cast %36 : vector<16xf32> to vector<16x1xf32>
    %38 = vector.broadcast %37 : vector<16x1xf32> to vector<16x128xf32>
    %39 = arith.subf %35, %38 : vector<16x128xf32>
    %40 = math.exp %39 : vector<16x128xf32>
    %cst_21 = arith.constant dense<0.000000e+00> : vector<16xf32>
    %41 = vector.multi_reduction <add>, %40, %cst_21 [1] : vector<16x128xf32> to vector<16xf32>
    %42 = vector.shape_cast %41 : vector<16xf32> to vector<16x1xf32>
    %43 = tpu.reciprocal %42 {approx = true} : vector<16x1xf32> -> vector<16x1xf32>
    %44 = vector.broadcast %43 : vector<16x1xf32> to vector<16x128xf32>
    %45 = arith.mulf %40, %44 : vector<16x128xf32>
    %c0_22 = arith.constant 0 : index
    %c1 = arith.constant 1 : index
    %c0_23 = arith.constant 0 : index
    %c0_24 = arith.constant 0 : index
    %46 = vector.load %arg6[%c0_22, %c1, %c0_23, %c0_24] : memref<1x4x16x128xf32, #tpu.memory_space<vmem>>, vector<1x1x16x128xf32>
    %47 = vector.shape_cast %46 : vector<1x1x16x128xf32> to vector<16x128xf32>
    %48 = vector.shape_cast %45 : vector<16x128xf32> to vector<1x1x16x128xf32>
    tpu.vector_store %arg6[%c0_22, %c1, %c0_23, %c0_24], %48 {strides = array<i32>} : memref<1x4x16x128xf32, #tpu.memory_space<vmem>>, vector<1x1x16x128xf32>,
    %49 = vector.extract_strided_slice %6 {offsets = [0, 64], sizes = [16, 32], strides = [1, 1]} : vector<16x128xbf16> to vector<16x32xbf16>
    %cst_25 = arith.constant dense<0.000000e+00> : vector<16x128xf32>
    %50 = tpu.matmul %49, %3, %cst_25 {dimension_numbers = #tpu.dot_dimension_numbers<[1], [1], [0], [0], [0, 0, 1, 0], [], []>} : vector<16x32xbf16>, vector<128x32xbf16>, vector<16x128xf32> -> vector<16x128xf32>
    %51 = arith.select %10, %50, %16 : vector<16x128xi1>, vector<16x128xf32>
    %cst_26 = arith.constant dense<0xFF800000> : vector<16xf32>
    %52 = vector.multi_reduction <maximumf>, %51, %cst_26 [1] : vector<16x128xf32> to vector<16xf32>
    %53 = vector.shape_cast %52 : vector<16xf32> to vector<16x1xf32>
    %54 = vector.broadcast %53 : vector<16x1xf32> to vector<16x128xf32>
    %55 = arith.subf %51, %54 : vector<16x128xf32>
    %56 = math.exp %55 : vector<16x128xf32>
    %cst_27 = arith.constant dense<0.000000e+00> : vector<16xf32>
    %57 = vector.multi_reduction <add>, %56, %cst_27 [1] : vector<16x128xf32> to vector<16xf32>
    %58 = vector.shape_cast %57 : vector<16xf32> to vector<16x1xf32>
    %59 = tpu.reciprocal %58 {approx = true} : vector<16x1xf32> -> vector<16x1xf32>
    %60 = vector.broadcast %59 : vector<16x1xf32> to vector<16x128xf32>
    %61 = arith.mulf %56, %60 : vector<16x128xf32>
    %c0_28 = arith.constant 0 : index
    %c2 = arith.constant 2 : index
    %c0_29 = arith.constant 0 : index
    %c0_30 = arith.constant 0 : index
    %62 = vector.load %arg6[%c0_28, %c2, %c0_29, %c0_30] : memref<1x4x16x128xf32, #tpu.memory_space<vmem>>, vector<1x1x16x128xf32>
    %63 = vector.shape_cast %62 : vector<1x1x16x128xf32> to vector<16x128xf32>
    %64 = vector.shape_cast %61 : vector<16x128xf32> to vector<1x1x16x128xf32>
    tpu.vector_store %arg6[%c0_28, %c2, %c0_29, %c0_30], %64 {strides = array<i32>} : memref<1x4x16x128xf32, #tpu.memory_space<vmem>>, vector<1x1x16x128xf32>,
    %65 = vector.extract_strided_slice %6 {offsets = [0, 96], sizes = [16, 32], strides = [1, 1]} : vector<16x128xbf16> to vector<16x32xbf16>
    %cst_31 = arith.constant dense<0.000000e+00> : vector<16x128xf32>
    %66 = tpu.matmul %65, %3, %cst_31 {dimension_numbers = #tpu.dot_dimension_numbers<[1], [1], [0], [0], [0, 0, 1, 0], [], []>} : vector<16x32xbf16>, vector<128x32xbf16>, vector<16x128xf32> -> vector<16x128xf32>
    %67 = arith.select %10, %66, %16 : vector<16x128xi1>, vector<16x128xf32>
    %cst_32 = arith.constant dense<0xFF800000> : vector<16xf32>
    %68 = vector.multi_reduction <maximumf>, %67, %cst_32 [1] : vector<16x128xf32> to vector<16xf32>
    %69 = vector.shape_cast %68 : vector<16xf32> to vector<16x1xf32>
    %70 = vector.broadcast %69 : vector<16x1xf32> to vector<16x128xf32>
    %71 = arith.subf %67, %70 : vector<16x128xf32>
    %72 = math.exp %71 : vector<16x128xf32>
    %cst_33 = arith.constant dense<0.000000e+00> : vector<16xf32>
    %73 = vector.multi_reduction <add>, %72, %cst_33 [1] : vector<16x128xf32> to vector<16xf32>
    %74 = vector.shape_cast %73 : vector<16xf32> to vector<16x1xf32>
    %75 = tpu.reciprocal %74 {approx = true} : vector<16x1xf32> -> vector<16x1xf32>
    %76 = vector.broadcast %75 : vector<16x1xf32> to vector<16x128xf32>
    %77 = arith.mulf %72, %76 : vector<16x128xf32>
    %c0_34 = arith.constant 0 : index
    %c3 = arith.constant 3 : index
    %c0_35 = arith.constant 0 : index
    %c0_36 = arith.constant 0 : index
    %78 = vector.load %arg6[%c0_34, %c3, %c0_35, %c0_36] : memref<1x4x16x128xf32, #tpu.memory_space<vmem>>, vector<1x1x16x128xf32>
    %79 = vector.shape_cast %78 : vector<1x1x16x128xf32> to vector<16x128xf32>
    %80 = vector.shape_cast %77 : vector<16x128xf32> to vector<1x1x16x128xf32>
    tpu.vector_store %arg6[%c0_34, %c3, %c0_35, %c0_36], %80 {strides = array<i32>} : memref<1x4x16x128xf32, #tpu.memory_space<vmem>>, vector<1x1x16x128xf32>,
    return
  }
  func.func @transform_0(%arg0: i32, %arg1: i32) -> (i32, i32, i32) {
    %c0_i32 = arith.constant 0 : i32
    %c0_i32_0 = arith.constant 0 : i32
    return %arg0, %arg1, %c0_i32 : i32, i32, i32
  }
  func.func @transform_1(%arg0: i32, %arg1: i32) -> (i32, i32, i32) {
    %c0_i32 = arith.constant 0 : i32
    %c0_i32_0 = arith.constant 0 : i32
    %c0_i32_1 = arith.constant 0 : i32
    return %arg0, %c0_i32, %c0_i32_0 : i32, i32, i32
  }
  func.func @transform_2(%arg0: i32, %arg1: i32) -> (i32, i32) {
    %c0_i32 = arith.constant 0 : i32
    %c0_i32_0 = arith.constant 0 : i32
    %c0_i32_1 = arith.constant 0 : i32
    return %c0_i32, %c0_i32_0 : i32, i32
  }
  func.func @transform_3(%arg0: i32, %arg1: i32) -> (i32, i32, i32) {
    %c0_i32 = arith.constant 0 : i32
    %c0_i32_0 = arith.constant 0 : i32
    return %arg0, %arg1, %c0_i32 : i32, i32, i32
  }
  func.func @transform_4(%arg0: i32, %arg1: i32) -> (i32, i32, i32, i32) {
    %c0_i32 = arith.constant 0 : i32
    %c0_i32_0 = arith.constant 0 : i32
    %c0_i32_1 = arith.constant 0 : i32
    return %arg0, %c0_i32, %arg1, %c0_i32_0 : i32, i32, i32, i32
  }
}

</mosaic_0001>

<llo_original>
// kernel: tpu_custom_call.1
$region0: #{tpu_custom_call.1}
  #allocation0 [shape = 'u32[]', space=smem, size = 0x4, offset = 0x4, fixed_abs, tag = 'smem constant byte address 0x4 - core index']
  #allocation1 [shape = 'u32[72,128]{1,0:T(1,128)}', space=vmem, size = 0x9000, scoped, tag = 'internal scratch']
  %s0 = inlined_call_operand.vmem [shape: bf16[2,16,32], index: 0, kind: input, shape index: {}]
  %s1 = inlined_call_operand.vmem [shape: bf16[2,128,32], index: 1, kind: input, shape index: {}]
  %s2 = inlined_call_operand.vmem [shape: bf16[32,128], index: 2, kind: input, shape index: {}]
  %s3 = inlined_call_operand.vmem [shape: s8[2,16,128], index: 3, kind: input, shape index: {}]
  %s4 = inlined_call_operand.hbm [shape: f32[2,4,16,128], index: 4, kind: output, shape index: {}]
  %s5 = sld [smem:[#allocation0]]
  $region49: #{tpu_custom_call.1} parent=0
    _
  %s7 = ssub.s32 1, %s5
  %s8 = scalar_select 0, %s7, %s5
  $region1: #{tpu_custom_call.1} parent=0
    #allocation2 [shape = 'u8[65536]{0}', space=vmem, size = 0x10000, scoped, tag = 'output window, operand 0']
    #allocation3 [shape = 's32[2]{0}', space=sflag, size = 0x8, scoped, tag = 'scoped memory for tpu_custom_call.1']
    %9 = vsyncpa [#allocation3], 0
    %s10 = scalar_lea.sflag [#allocation3], 1
    %11 = vsyncpa %s10, 0
    loop: start=0, step=1, limit=4
    $region2: #{tpu_custom_call.1} parent=1 // loop_pre_header
      _
    $region3: #{tpu_custom_call.1} parent=1 // loop_header
      %s13 = sphi 0, %s17
      %p14 = scmp.ge.s32.totalorder %s13, 4
      %s20 = sphi 0, %s32
      %s21 = sphi 0, %s28
      %s22 = sphi 0, %s20
      %s23 = sphi 0, %s21
      %s24 = sphi 0, %s22
      %s25 = sphi 0, %s23
      %s37 = sphi 0, %s39
      %s40 = sphi 0, %s37
      %s41 = sphi 0, %s40
      %s57 = sphi 0, %s41
      %s63 = sphi 0, %s65
      %s66 = sphi 0, %s63
      %s67 = sphi 0, %s66
      %s83 = sphi 0, %s67
      %s87 = sphi 0, %s87
      %s89 = sphi 0, %s87
      %s90 = sphi 0, %s89
      %s104 = sphi 0, %s90
      %s112 = sphi 0, %s114
      %s115 = sphi 0, %s112
      %s116 = sphi 0, %s115
      %s132 = sphi 0, %s116
      %s140 = sphi 0, %s142
      %s143 = sphi 0, %s140
      %s144 = sphi 0, %s143
      %s160 = sphi 0, %s144
    $region4: #{tpu_custom_call.1} parent=1 // loop_header_branch
      %16 = sbr.rel (%p14) target = $region8
    $region5: #{tpu_custom_call.1} parent=1 // loop_body
      %s18 = ssub.s32 %s13, 1
      %s19 = ssub.s32 %s13, 2
      %s26 = sadd.s32 1, %s21
      %p27 = scmp.ge.s32.totalorder %s26, 1
      %s28 = scalar_select %p27, 0, %s26
      %s29 = sadd.s32 1, %s20
      %s30 = scalar_select %p27, %s29, %s20
      %p31 = scmp.ge.s32.totalorder %s30, 2
      %s32 = scalar_select %p31, 0, %s30
      %s33 = ssub.s32 %s20, %s32
      %s34 = ssub.s32 %s21, %s28
      %s35 = sor.u32 %s33, %s34
      %p36 = scmp.eq.s32.totalorder %s35, 0
      %s38 = sadd.s32 %s37, 1
      %s39 = scalar_select %p36, %s37, %s38
      %p42 = pneg %p36
      %p43 = scmp.eq.s32.totalorder %s13, 1
      %p44 = por %p42, %p43
      %p45 = scmp.ne.s32.totalorder %s37, %s40
      %p46 = scmp.eq.s32.totalorder %s13, 0
      %p47 = por %p45, %p46
      %p48 = scmp.ne.s32.totalorder %s37, %s40
      %p49 = scmp.eq.s32.totalorder %s18, 1
      %p50 = por %p48, %p49
      %p51 = scmp.ne.s32.totalorder %s40, %s41
      %p52 = scmp.eq.s32.totalorder %s18, 0
      %p53 = por %p51, %p52
      %p54 = scmp.ne.s32.totalorder %s40, %s41
      %p55 = scmp.eq.s32.totalorder %s19, 1
      %p56 = por %p54, %p55
      %p58 = scmp.ne.s32.totalorder %s41, %s57
      %p59 = scmp.eq.s32.totalorder %s19, 0
      %p60 = por %p58, %p59
      %s61 = ssub.s32 %s20, %s32
      %p62 = scmp.eq.s32.totalorder %s61, 0
      %s64 = sadd.s32 %s63, 1
      %s65 = scalar_select %p62, %s63, %s64
      %p68 = pneg %p62
      %p69 = scmp.eq.s32.totalorder %s13, 1
      %p70 = por %p68, %p69
      %p71 = scmp.ne.s32.totalorder %s63, %s66
      %p72 = scmp.eq.s32.totalorder %s13, 0
      %p73 = por %p71, %p72
      %p74 = scmp.ne.s32.totalorder %s63, %s66
      %p75 = scmp.eq.s32.totalorder %s18, 1
      %p76 = por %p74, %p75
      %p77 = scmp.ne.s32.totalorder %s66, %s67
      %p78 = scmp.eq.s32.totalorder %s18, 0
      %p79 = por %p77, %p78
      %p80 = scmp.ne.s32.totalorder %s66, %s67
      %p81 = scmp.eq.s32.totalorder %s19, 1
      %p82 = por %p80, %p81
      %p84 = scmp.ne.s32.totalorder %s67, %s83
      %p85 = scmp.eq.s32.totalorder %s19, 0
      %p86 = por %p84, %p85
      %s88 = sadd.s32 %s87, 1
      %p91 = scmp.eq.s32.totalorder %s13, 1
      %p92 = scmp.ne.s32.totalorder %s87, %s89
      %p93 = scmp.eq.s32.totalorder %s13, 0
      %p94 = por %p92, %p93
      %p95 = scmp.ne.s32.totalorder %s87, %s89
      %p96 = scmp.eq.s32.totalorder %s18, 1
      %p97 = por %p95, %p96
      %p98 = scmp.ne.s32.totalorder %s89, %s90
      %p99 = scmp.eq.s32.totalorder %s18, 0
      %p100 = por %p98, %p99
      %p101 = scmp.ne.s32.totalorder %s89, %s90
      %p102 = scmp.eq.s32.totalorder %s19, 1
      %p103 = por %p101, %p102
      %p105 = scmp.ne.s32.totalorder %s90, %s104
      %p106 = scmp.eq.s32.totalorder %s19, 0
      %p107 = por %p105, %p106
      %s108 = ssub.s32 %s20, %s32
      %s109 = ssub.s32 %s21, %s28
      %s110 = sor.u32 %s108, %s109
      %p111 = scmp.eq.s32.totalorder %s110, 0
      %s113 = sadd.s32 %s112, 1
      %s114 = scalar_select %p111, %s112, %s113
      %p117 = pneg %p111
      %p118 = scmp.eq.s32.totalorder %s13, 1
      %p119 = por %p117, %p118
      %p120 = scmp.ne.s32.totalorder %s112, %s115
      %p121 = scmp.eq.s32.totalorder %s13, 0
      %p122 = por %p120, %p121
      %p123 = scmp.ne.s32.totalorder %s112, %s115
      %p124 = scmp.eq.s32.totalorder %s18, 1
      %p125 = por %p123, %p124
      %p126 = scmp.ne.s32.totalorder %s115, %s116
      %p127 = scmp.eq.s32.totalorder %s18, 0
      %p128 = por %p126, %p127
      %p129 = scmp.ne.s32.totalorder %s115, %s116
      %p130 = scmp.eq.s32.totalorder %s19, 1
      %p131 = por %p129, %p130
      %p133 = scmp.ne.s32.totalorder %s116, %s132
      %p134 = scmp.eq.s32.totalorder %s19, 0
      %p135 = por %p133, %p134
      %s136 = ssub.s32 %s20, %s32
      %s137 = ssub.s32 %s21, %s28
      %s138 = sor.u32 %s136, %s137
      %p139 = scmp.eq.s32.totalorder %s138, 0
      %s141 = sadd.s32 %s140, 1
      %s142 = scalar_select %p139, %s140, %s141
      %p145 = pneg %p139
      %p146 = scmp.eq.s32.totalorder %s13, 1
      %p147 = por %p145, %p146
      %p148 = scmp.ne.s32.totalorder %s140, %s143
      %p149 = scmp.eq.s32.totalorder %s13, 0
      %p150 = por %p148, %p149
      %p151 = scmp.ne.s32.totalorder %s140, %s143
      %p152 = scmp.eq.s32.totalorder %s18, 1
      %p153 = por %p151, %p152
      %p154 = scmp.ne.s32.totalorder %s143, %s144
      %p155 = scmp.eq.s32.totalorder %s18, 0
      %p156 = por %p154, %p155
      %p157 = scmp.ne.s32.totalorder %s143, %s144
      %p158 = scmp.eq.s32.totalorder %s19, 1
      %p159 = por %p157, %p158
      %p161 = scmp.ne.s32.totalorder %s144, %s160
      %p162 = scmp.eq.s32.totalorder %s19, 0
      %p163 = por %p161, %p162
      %p164 = scmp.le.s32.totalorder 1, %s13
      %p165 = scmp.lt.s32.totalorder %s13, 3
      %p166 = pnand %p164, %p165
      %p167 = pneg %p166
      // Predicated region
      $region9: #{tpu_custom_call.1} parent=5 // pred_check
        _
      $region10: #{tpu_custom_call.1} parent=5 // pred_check_branch
        %169 = sbr.rel (%p166) target = $region12
      $region11: #{tpu_custom_call.1} parent=5 // pred_region
        %s170 = ssub.s32 %s13, 1
        // Predicated region
        $region13: #{tpu_custom_call.1} parent=11 // pred_check
          %p171 = pneg %p100
        $region14: #{tpu_custom_call.1} parent=11 // pred_check_branch
          %173 = sbr.rel (%p171) target = $region16
        $region15: #{tpu_custom_call.1} parent=11 // pred_region
          _
        $region16: #{tpu_custom_call.1} parent=11 // pred_fallthru
          _
      $region12: #{tpu_custom_call.1} parent=5 // pred_fallthru
        _
      %p174 = scmp.lt.s32.totalorder %s13, 2
      // Predicated region
      $region17: #{tpu_custom_call.1} parent=5 // pred_check
        %p175 = pneg %p174
      $region18: #{tpu_custom_call.1} parent=5 // pred_check_branch
        %177 = sbr.rel (%p175) target = $region20
      $region19: #{tpu_custom_call.1} parent=5 // pred_region
        // Predicated region
        $region21: #{tpu_custom_call.1} parent=19 // pred_check
          %p178 = pneg %p47
        $region22: #{tpu_custom_call.1} parent=19 // pred_check_branch
          %180 = sbr.rel (%p178) target = $region24
        $region23: #{tpu_custom_call.1} parent=19 // pred_region
          %s181 = smul.u32 2, %s21
          %p182 = scmp.lt.s32.totalorder %s20, 1
          %s183 = scalar_select %p182, %s20, 1
          %p184 = scmp.lt.s32.totalorder %s181, 1
          %s185 = scalar_select %p184, %s181, 1
          %s186 = smul.addr %s183, 2
          %s187 = sadd.s32 %s185, %s186
          %s188 = smul.addr %s187, 4
          %s189 = scalar_lea.vmem %s0, %s188
          %s190 = smul.u32 2, %s21
        $region24: #{tpu_custom_call.1} parent=19 // pred_fallthru
          _
        // Predicated region
        $region25: #{tpu_custom_call.1} parent=19 // pred_check
          %p191 = pneg %p73
        $region26: #{tpu_custom_call.1} parent=19 // pred_check_branch
          %193 = sbr.rel (%p191) target = $region28
        $region27: #{tpu_custom_call.1} parent=19 // pred_region
          %p194 = scmp.lt.s32.totalorder %s20, 1
          %s195 = scalar_select %p194, %s20, 1
          %s196 = smul.addr %s195, 16
          %s197 = smul.addr %s196, 4
          %s198 = scalar_lea.vmem %s1, %s197
        $region28: #{tpu_custom_call.1} parent=19 // pred_fallthru
          _
        // Predicated region
        $region29: #{tpu_custom_call.1} parent=19 // pred_check
          %p199 = pneg %p122
        $region30: #{tpu_custom_call.1} parent=19 // pred_check_branch
          %201 = sbr.rel (%p199) target = $region32
        $region31: #{tpu_custom_call.1} parent=19 // pred_region
          %s202 = smul.u32 2, %s21
          %p203 = scmp.lt.s32.totalorder %s20, 1
          %s204 = scalar_select %p203, %s20, 1
          %p205 = scmp.lt.s32.totalorder %s202, 1
          %s206 = scalar_select %p205, %s202, 1
          %s207 = smul.addr %s204, 2
          %s208 = sadd.s32 %s206, %s207
          %s209 = smul.addr %s208, 2
          %s210 = scalar_lea.vmem %s3, %s209
          %s211 = smul.u32 2, %s21
        $region32: #{tpu_custom_call.1} parent=19 // pred_fallthru
          _
      $region20: #{tpu_custom_call.1} parent=5 // pred_fallthru
        _
      %p212 = scmp.le.s32.totalorder 1, %s13
      %p213 = scmp.lt.s32.totalorder %s13, 3
      %p214 = pnand %p212, %p213
      %p215 = pneg %p214
      // Predicated region
      $region33: #{tpu_custom_call.1} parent=5 // pred_check
        _
      $region34: #{tpu_custom_call.1} parent=5 // pred_check_branch
        %217 = sbr.rel (%p214) target = $region36
      $region35: #{tpu_custom_call.1} parent=5 // pred_region
        %s218 = ssub.s32 %s13, 1
        %s219 = smul.u32 2, %s23
        %p220 = scmp.lt.s32.totalorder %s22, 1
        %s221 = scalar_select %p220, %s22, 1
        %p222 = scmp.lt.s32.totalorder %s219, 1
        %s223 = scalar_select %p222, %s219, 1
        %s224 = smul.addr %s221, 2
        %s225 = sadd.s32 %s223, %s224
        %s226 = smul.addr %s225, 4
        %s227 = scalar_lea.vmem %s0, %s226
        %p228 = pneg %p53
        %p229 = pneg %p50
        %p230 = scmp.lt.s32.totalorder %s22, 1
        %s231 = scalar_select %p230, %s22, 1
        %s232 = smul.addr %s231, 16
        %s233 = smul.addr %s232, 4
        %s234 = scalar_lea.vmem %s1, %s233
        %p235 = pneg %p79
        %p236 = pneg %p76
        %p237 = pneg %p100
        %p238 = pneg %p97
        %s239 = smul.u32 2, %s23
        %p240 = scmp.lt.s32.totalorder %s22, 1
        %s241 = scalar_select %p240, %s22, 1
        %p242 = scmp.lt.s32.totalorder %s239, 1
        %s243 = scalar_select %p242, %s239, 1
        %s244 = smul.addr %s241, 2
        %s245 = sadd.s32 %s243, %s244
        %s246 = smul.addr %s245, 2
        %s247 = scalar_lea.vmem %s3, %s246
        %p248 = pneg %p128
        %p249 = pneg %p125
        %p250 = pneg %p156
        %p251 = pneg %p153
        %s252 = sand.u32 %s143, 1
        %s253 = scalar_lea.sflag [#allocation3], %s252
        %s254 = sand.u32 %s143, 1
        %s255 = smul.addr %s254, 64
        %s256 = scalar_lea.vmem [#allocation2], %s255
        %s257 = smul.u32 2, %s23
        %p258 = scmp.lt.s32.totalorder %s22, 1
        %s259 = scalar_select %p258, %s22, 1
        %p260 = scmp.lt.s32.totalorder %s257, 1
        %s261 = scalar_select %p260, %s257, 1
        %s262 = smul.addr %s259, 2
        %s263 = sadd.s32 %s261, %s262
        %s264 = smul.addr %s263, 4
        %s265 = scalar_lea.vmem %s0, %s264
        %s266 = smul.u32 2, %s23
        %p267 = scmp.lt.s32.totalorder %s22, 1
        %s268 = scalar_select %p267, %s22, 1
        %s269 = smul.addr %s268, 16
        %s270 = smul.addr %s269, 4
        %s271 = scalar_lea.vmem %s1, %s270
        %s272 = smul.u32 2, %s23
        %p273 = scmp.lt.s32.totalorder %s22, 1
        %s274 = scalar_select %p273, %s22, 1
        %p275 = scmp.lt.s32.totalorder %s272, 1
        %s276 = scalar_select %p275, %s272, 1
        %s277 = smul.addr %s274, 2
        %s278 = sadd.s32 %s276, %s277
        %s279 = smul.addr %s278, 2
        %s280 = scalar_lea.vmem %s3, %s279
        %s281 = smul.u32 2, %s23
        %s282 = smul.u32 2, %s23
        %v286 = vld [vmem:[%s265] sm:$0xf]
        %v287 = vld [vmem:[%s265 + $0x4] sm:$0xf]
        %v288 = vld [vmem:[%s271] sm:$0xf]
        %v289 = vld [vmem:[%s271 + $0x4] sm:$0xf]
        %v290 = vld [vmem:[%s271 + $0x8] sm:$0xf]
        %v291 = vld [vmem:[%s271 + $0xc] sm:$0xf]
        %v292 = vld [vmem:[%s271 + $0x10] sm:$0xf]
        %v293 = vld [vmem:[%s271 + $0x14] sm:$0xf]
        %v294 = vld [vmem:[%s271 + $0x18] sm:$0xf]
        %v295 = vld [vmem:[%s271 + $0x1c] sm:$0xf]
        %v296 = vld [vmem:[%s271 + $0x20] sm:$0xf]
        %v297 = vld [vmem:[%s271 + $0x24] sm:$0xf]
        %v298 = vld [vmem:[%s271 + $0x28] sm:$0xf]
        %v299 = vld [vmem:[%s271 + $0x2c] sm:$0xf]
        %v300 = vld [vmem:[%s271 + $0x30] sm:$0xf]
        %v301 = vld [vmem:[%s271 + $0x34] sm:$0xf]
        %v302 = vld [vmem:[%s271 + $0x38] sm:$0xf]
        %v303 = vld [vmem:[%s271 + $0x3c] sm:$0xf]
        %v304 = vld [vmem:[%s2] sm:$0xf]
        %v305 = vld [vmem:[%s2 + $0x4] sm:$0xf]
        %v306 = vld [vmem:[%s2 + $0x8] sm:$0xf]
        %v307 = vld [vmem:[%s2 + $0xc] sm:$0xf]
        %v310 = vunpack.c.l.b16 %v286
        %v311 = vunpack.c.l.b16 %v287
        %v312 = vpack.c.b16 %v311, %v310
        %v317 = vunpack.c.l.b16 %v304
        %v318 = vunpack.c.l.b16 %v305
        %v319 = vunpack.c.l.b16 %v306
        %v320 = vunpack.c.l.b16 %v307
        %v321 = vpack.c.b16 %v318, %v317
        %v322 = vpack.c.b16 %v320, %v319
        %vm325 = vcmask 261120
        %v327 = vsel %vm325, %v312, 0
        %329 = vmatpush.bf16.msra.mxu0 0
        %330 = vmatpush.bf16.msra.mxu0 0
        %331 = vmatpush.bf16.msra.mxu0 0
        %332 = vmatpush.bf16.msra.mxu0 0
        %333 = vmatpush.bf16.msra.mxu0 0
        %334 = vmatpush.bf16.msra.mxu0 0
        %335 = vmatpush.bf16.msra.mxu0 %v322
        %336 = vmatpush.bf16.msra.mxu0 %v321
        %337 = vmatmul.bf16.gmra.mxu0 %v327
        %v338 = vpop.f32.mrf.mxu0
        %v339 = vadd.f32 0.0, %v338
        %v340 = vpop.f32.mrf.mxu0
        %v341 = vadd.f32 0.0, %v340
        %342 = vdwg.mxu0
        %v343 = vpack.c.bf16 %v339, %v339
        %v344 = vpack.c.bf16 %v341, %v341
        %v345 = vld [vmem:[%s280] sm:$0x3]
        %v346 = vld [vmem:[%s280 + $0x2] sm:$0x3]
        %vm347 = vnez %v345
        %vm348 = vnez %v346
        %v349 = vlaneseq
        %v350 = vand.u32 %v349, 127
        %vm351 = vcmp.lt.s32.totalorder %v350, 16
        %v352 = vsel %vm351, -1e+09, -inf
        %v355 = vunpack.c.l.b16 %v343
        %v356 = vunpack.c.l.b16 %v344
        %v357 = vpack.c.b16 %v356, %v355
        %v374 = vunpack.c.l.b16 %v288
        %v375 = vunpack.c.l.b16 %v289
        %v376 = vunpack.c.l.b16 %v290
        %v377 = vunpack.c.l.b16 %v291
        %v378 = vunpack.c.l.b16 %v292
        %v379 = vunpack.c.l.b16 %v293
        %v380 = vunpack.c.l.b16 %v294
        %v381 = vunpack.c.l.b16 %v295
        %v382 = vunpack.c.l.b16 %v296
        %v383 = vunpack.c.l.b16 %v297
        %v384 = vunpack.c.l.b16 %v298
        %v385 = vunpack.c.l.b16 %v299
        %v386 = vunpack.c.l.b16 %v300
        %v387 = vunpack.c.l.b16 %v301
        %v388 = vunpack.c.l.b16 %v302
        %v389 = vunpack.c.l.b16 %v303
        %v390 = vpack.c.b16 %v375, %v374
        %v391 = vpack.c.b16 %v377, %v376
        %v392 = vpack.c.b16 %v379, %v378
        %v393 = vpack.c.b16 %v381, %v380
        %v394 = vpack.c.b16 %v383, %v382
        %v395 = vpack.c.b16 %v385, %v384
        %v396 = vpack.c.b16 %v387, %v386
        %v397 = vpack.c.b16 %v389, %v388
        %v399 = vsel %vm325, %v357, 0
        %v402 = vsel %vm325, %v390, 0
        %v405 = vsel %vm325, %v391, 0
        %v408 = vsel %vm325, %v392, 0
        %v411 = vsel %vm325, %v393, 0
        %v414 = vsel %vm325, %v394, 0
        %v417 = vsel %vm325, %v395, 0
        %v420 = vsel %vm325, %v396, 0
        %v423 = vsel %vm325, %v397, 0
        %425 = vmatpush.bf16.xpose.msra.mxu0 %v423
        %426 = vmatpush.bf16.xpose.msra.mxu0 %v420
        %427 = vmatpush.bf16.xpose.msra.mxu0 %v417
        %428 = vmatpush.bf16.xpose.msra.mxu0 %v414
        %429 = vmatpush.bf16.xpose.msra.mxu0 %v411
        %430 = vmatpush.bf16.xpose.msra.mxu0 %v408
        %431 = vmatpush.bf16.xpose.msra.mxu0 %v405
        %432 = vmatpush.bf16.xpose.msra.mxu0 %v402
        %433 = vmatmul.bf16.gmra.mxu0 %v399
        %v434 = vpop.f32.mrf.mxu0
        %v435 = vadd.f32 0.0, %v434
        %v436 = vpop.f32.mrf.mxu0
        %v437 = vadd.f32 0.0, %v436
        %438 = vdwg.mxu0
        %v439 = vsel %vm347, 16843009, 0
        %v440 = vsel %vm348, 16843009, 0
        %v441 = vunpack.c.0.s8 %v439
        %v442 = vunpack.c.0.s8 %v440
        %vm443 = vcmp.ne.s32.totalorder %v441, 0
        %vm444 = vcmp.ne.s32.totalorder %v442, 0
        %v445 = vsel %vm443, %v435, %v352
        %v446 = vsel %vm444, %v437, %v352
        %447 = vmax.xlane.f32.xlu0 %v445
        %v448 = vpop.xlane.xlu0 %447
        %449 = vmax.xlane.f32.xlu0 %v446
        %v450 = vpop.xlane.xlu0 %449
        %v451 = vsub.f32 %v445, %v448
        %v452 = vsub.f32 %v446, %v450
        %v453 = vmul.f32 %v451, 1.442695
        %v454 = vpow.pop %v453
        %v455 = vmul.f32 %v452, 1.442695
        %v456 = vpow.pop %v455
        %457 = vadd.xlane.f32.xlu0 %v454
        %v458 = vpop.xlane.xlu0 %457
        %459 = vadd.xlane.f32.xlu0 %v456
        %v460 = vpop.xlane.xlu0 %459
        %v461 = vrcp.pop %v458
        %v462 = vrcp.pop %v460
        %v463 = vmul.f32 %v454, %v461
        %v464 = vmul.f32 %v456, %v462
        %465 = vst [vmem:[%s256] sm:$0xff] %v463
        %466 = vst [vmem:[%s256 + $0x8] sm:$0xff] %v464
        %467 = vrot.lane.b32.xlu0 %v357, 96
        %v468 = vpop.permute.xlu0 %467
        %v470 = vsel %vm325, %v468, 0
        %472 = vmatpush.bf16.xpose.msra.mxu0 %v423
        %473 = vmatpush.bf16.xpose.msra.mxu0 %v420
        %474 = vmatpush.bf16.xpose.msra.mxu0 %v417
        %475 = vmatpush.bf16.xpose.msra.mxu0 %v414
        %476 = vmatpush.bf16.xpose.msra.mxu0 %v411
        %477 = vmatpush.bf16.xpose.msra.mxu0 %v408
        %478 = vmatpush.bf16.xpose.msra.mxu0 %v405
        %479 = vmatpush.bf16.xpose.msra.mxu0 %v402
        %480 = vmatmul.bf16.gmra.mxu0 %v470
        %v481 = vpop.f32.mrf.mxu0
        %v482 = vadd.f32 0.0, %v481
        %v483 = vpop.f32.mrf.mxu0
        %v484 = vadd.f32 0.0, %v483
        %485 = vdwg.mxu0
        %v486 = vsel %vm443, %v482, %v352
        %v487 = vsel %vm444, %v484, %v352
        %488 = vmax.xlane.f32.xlu0 %v486
        %v489 = vpop.xlane.xlu0 %488
        %490 = vmax.xlane.f32.xlu0 %v487
        %v491 = vpop.xlane.xlu0 %490
        %v492 = vsub.f32 %v486, %v489
        %v493 = vsub.f32 %v487, %v491
        %v494 = vmul.f32 %v492, 1.442695
        %v495 = vpow.pop %v494
        %v496 = vmul.f32 %v493, 1.442695
        %v497 = vpow.pop %v496
        %498 = vadd.xlane.f32.xlu0 %v495
        %v499 = vpop.xlane.xlu0 %498
        %500 = vadd.xlane.f32.xlu0 %v497
        %v501 = vpop.xlane.xlu0 %500
        %v502 = vrcp.pop %v499
        %v503 = vrcp.pop %v501
        %v504 = vmul.f32 %v495, %v502
        %v505 = vmul.f32 %v497, %v503
        %s506 = scalar_lea.vmem %s256, 16 [#allocation2]
        %507 = vst [vmem:[%s506] sm:$0xff] %v504
        %508 = vst [vmem:[%s506 + $0x8] sm:$0xff] %v505
        %509 = vrot.lane.b32.xlu0 %v357, 64
        %v510 = vpop.permute.xlu0 %509
        %v512 = vsel %vm325, %v510, 0
        %514 = vmatpush.bf16.xpose.msra.mxu0 %v423
        %515 = vmatpush.bf16.xpose.msra.mxu0 %v420
        %516 = vmatpush.bf16.xpose.msra.mxu0 %v417
        %517 = vmatpush.bf16.xpose.msra.mxu0 %v414
        %518 = vmatpush.bf16.xpose.msra.mxu0 %v411
        %519 = vmatpush.bf16.xpose.msra.mxu0 %v408
        %520 = vmatpush.bf16.xpose.msra.mxu0 %v405
        %521 = vmatpush.bf16.xpose.msra.mxu0 %v402
        %522 = vmatmul.bf16.gmra.mxu0 %v512
        %v523 = vpop.f32.mrf.mxu0
        %v524 = vadd.f32 0.0, %v523
        %v525 = vpop.f32.mrf.mxu0
        %v526 = vadd.f32 0.0, %v525
        %527 = vdwg.mxu0
        %v528 = vsel %vm443, %v524, %v352
        %v529 = vsel %vm444, %v526, %v352
        %530 = vmax.xlane.f32.xlu0 %v528
        %v531 = vpop.xlane.xlu0 %530
        %532 = vmax.xlane.f32.xlu0 %v529
        %v533 = vpop.xlane.xlu0 %532
        %v534 = vsub.f32 %v528, %v531
        %v535 = vsub.f32 %v529, %v533
        %v536 = vmul.f32 %v534, 1.442695
        %v537 = vpow.pop %v536
        %v538 = vmul.f32 %v535, 1.442695
        %v539 = vpow.pop %v538
        %540 = vadd.xlane.f32.xlu0 %v537
        %v541 = vpop.xlane.xlu0 %540
        %542 = vadd.xlane.f32.xlu0 %v539
        %v543 = vpop.xlane.xlu0 %542
        %v544 = vrcp.pop %v541
        %v545 = vrcp.pop %v543
        %v546 = vmul.f32 %v537, %v544
        %v547 = vmul.f32 %v539, %v545
        %s548 = scalar_lea.vmem %s256, 32 [#allocation2]
        %549 = vst [vmem:[%s548] sm:$0xff] %v546
        %550 = vst [vmem:[%s548 + $0x8] sm:$0xff] %v547
        %551 = vrot.lane.b32.xlu0 %v357, 32
        %v552 = vpop.permute.xlu0 %551
        %v554 = vsel %vm325, %v552, 0
        %556 = vmatpush.bf16.xpose.msra.mxu0 %v423
        %557 = vmatpush.bf16.xpose.msra.mxu0 %v420
        %558 = vmatpush.bf16.xpose.msra.mxu0 %v417
        %559 = vmatpush.bf16.xpose.msra.mxu0 %v414
        %560 = vmatpush.bf16.xpose.msra.mxu0 %v411
        %561 = vmatpush.bf16.xpose.msra.mxu0 %v408
        %562 = vmatpush.bf16.xpose.msra.mxu0 %v405
        %563 = vmatpush.bf16.xpose.msra.mxu0 %v402
        %564 = vmatmul.bf16.gmra.mxu0 %v554
        %v565 = vpop.f32.mrf.mxu0
        %v566 = vadd.f32 0.0, %v565
        %v567 = vpop.f32.mrf.mxu0
        %v568 = vadd.f32 0.0, %v567
        %569 = vdwg.mxu0
        %v570 = vsel %vm443, %v566, %v352
        %v571 = vsel %vm444, %v568, %v352
        %572 = vmax.xlane.f32.xlu0 %v570
        %v573 = vpop.xlane.xlu0 %572
        %574 = vmax.xlane.f32.xlu0 %v571
        %v575 = vpop.xlane.xlu0 %574
        %v576 = vsub.f32 %v570, %v573
        %v577 = vsub.f32 %v571, %v575
        %v578 = vmul.f32 %v576, 1.442695
        %v579 = vpow.pop %v578
        %v580 = vmul.f32 %v577, 1.442695
        %v581 = vpow.pop %v580
        %582 = vadd.xlane.f32.xlu0 %v579
        %v583 = vpop.xlane.xlu0 %582
        %584 = vadd.xlane.f32.xlu0 %v581
        %v585 = vpop.xlane.xlu0 %584
        %v586 = vrcp.pop %v583
        %v587 = vrcp.pop %v585
        %v588 = vmul.f32 %v579, %v586
        %v589 = vmul.f32 %v581, %v587
        %s590 = scalar_lea.vmem %s256, 48 [#allocation2]
        %591 = vst [vmem:[%s590] sm:$0xff] %v588
        %592 = vst [vmem:[%s590 + $0x8] sm:$0xff] %v589
        %s593 = sand.u32 %s143, 1
        %s594 = scalar_lea.sflag [#allocation3], %s593
        %s595 = sand.u32 %s143, 1
        %s596 = smul.addr %s595, 64
        %s597 = scalar_lea.vmem [#allocation2], %s596
        // Predicated region
        $region37: #{tpu_custom_call.1} parent=35 // pred_check
          %p598 = pneg %p153
        $region38: #{tpu_custom_call.1} parent=35 // pred_check_branch
          %600 = sbr.rel (%p598) target = $region40
        $region39: #{tpu_custom_call.1} parent=35 // pred_region
          %s601 = smul.u32 2, %s23
          %603 = vsyncadd %s594, 0
          %s604 = smul.addr %s22, 8
          %s605 = sadd.s32 %s601, %s604
          %s606 = smul.addr %s605, 8
          %s607 = scalar_lea.hbm %s4, %s606
          %s608 = sshll.u32 %s597, 4
          %s609 = int_to_ptr.vmem [resolvable:$true] %s608
          %s610 = sshll.u32 %s607, 4
          %s611 = int_to_ptr.hbm [resolvable:$true] %s610
          %616 = dma.vmem_to_hbm [thread:$0]  %s609, 1024, %s611, %s594, 128, 128, 8
        $region40: #{tpu_custom_call.1} parent=35 // pred_fallthru
          _
      $region36: #{tpu_custom_call.1} parent=5 // pred_fallthru
        _
      %p617 = scmp.le.s32.totalorder 2, %s13
      // Predicated region
      $region41: #{tpu_custom_call.1} parent=5 // pred_check
        %p618 = pneg %p617
      $region42: #{tpu_custom_call.1} parent=5 // pred_check_branch
        %620 = sbr.rel (%p618) target = $region44
      $region43: #{tpu_custom_call.1} parent=5 // pred_region
        %s621 = ssub.s32 %s13, 2
        // Predicated region
        $region45: #{tpu_custom_call.1} parent=43 // pred_check
          %p622 = pneg %p159
        $region46: #{tpu_custom_call.1} parent=43 // pred_check_branch
          %624 = sbr.rel (%p622) target = $region48
        $region47: #{tpu_custom_call.1} parent=43 // pred_region
          %s625 = sand.u32 %s144, 1
          %s626 = scalar_lea.sflag [#allocation3], %s625
          %s627 = sand.u32 %s144, 1
          %s628 = smul.addr %s627, 64
          %s629 = scalar_lea.vmem [#allocation2], %s628
          %631 = dma.done %s626, 1024
        $region48: #{tpu_custom_call.1} parent=43 // pred_fallthru
          _
      $region44: #{tpu_custom_call.1} parent=5 // pred_fallthru
        _
    $region6: #{tpu_custom_call.1} parent=1 // loop_footer
      %s17 = sadd.s32 1, %s13
    $region7: #{tpu_custom_call.1} parent=1 // loop_footer_branch
      %12 = sbr.rel target = $region3
    $region8: #{tpu_custom_call.1} parent=1 // loop_exit
      _
    %632 = vsyncpa [#allocation3], 1
    %s633 = scalar_lea.sflag [#allocation3], 1
    %634 = vsyncpa %s633, 1

</llo_original>
